<compile_context>
chip_gen: v5e
topology: v5e:2x2
jax: 0.10.0
libtpu: 0.0.40
codegen_flags: <defaults>
</compile_context>

<pallas_src>
import jax
import jax.numpy as jnp
import numpy as np
from jax import lax
from jax.experimental import pallas as pl
from jax.experimental.pallas import tpu as pltpu

# FLAGS analogues (small, deterministic)
VOCAB_SIZE = 256   # FLAGS.vocab_size
EMB_SIZE = 64      # FLAGS.emb_size -> max+sum concat gives 128 == hard-coded dense isize
MAX_LEN = 16       # FLAGS.max_len
NUM_AGE = 10
OUT_LANES = 128    # lane-dense output slab width

# Output-slab column layout
COL_GENDER = 0
COL_AGE0 = 1                    # cols 1..10 -> age logits
COL_PRED_GENDER = 11            # sigmoid(gender)
COL_PRED_AGE = 12               # argmax(age), stored as float

_TB_MAX = 256                   # batch-tile cap (VMEM-safe on v5e's 16 MiB default, cf. vmem_limit)


def _choose_tb(batch):
    """Batch sequences per grid step. Keep grid >= 2 for large batches (v7x dual-TC)."""
    if batch <= 8:
        return batch                      # block covers the full (unpadded) batch dim
    if batch <= 2 * _TB_MAX:
        half = (batch + 1) // 2
        return ((half + 7) // 8) * 8      # two grid steps, sublane-aligned tile
    return _TB_MAX


def cls_model2_kernel(ids_ref, emb_ref, w_ref, b_ref, out_ref):
    tb, seq_len = ids_ref.shape           # (TB, L)
    vocab, emb_dim = emb_ref.shape
    rows = tb * seq_len

    ids = ids_ref[...]                    # (TB, L) int32
    ids3 = ids[..., None]                 # (TB, L, 1) -- tiny in-register relayout
    valid3 = ids3 != 0                    # (TB, L, 1) padding mask

    # Embedding lookup as a masked one-hot matmul on the MXU. Padding ids (==0)
    # get an all-zero one-hot row, so padded tokens embed to exact zeros (sum-pool mask).
    # TODO(synk): for realistic vocab sizes (>~4k) switch to a gather-style lookup
    # (PrefetchScalarGridSpec + pl.Element row indices) instead of a (rows, V) one-hot.
    iota_v = lax.broadcasted_iota(jnp.int32, (tb, seq_len, vocab), 2)
    onehot3 = jnp.logical_and(ids3 == iota_v, valid3)                     # (TB, L, V) bool
    onehot = onehot3.reshape(rows, vocab).astype(jnp.float32)             # layout-preserving
    x = jnp.dot(onehot, emb_ref[...], preferred_element_type=jnp.float32)  # (rows, E)

    # Vectorized max/sum pooling over the sequence axis (layout-preserving 3-D view).
    x3 = x.reshape(tb, seq_len, emb_dim)                                  # (TB, L, E)
    sum_pool = jnp.sum(x3, axis=1)                                        # (TB, E) padded rows = 0
    max_pool = jnp.max(jnp.where(valid3, x3, -jnp.inf), axis=1)           # (TB, E)

    # pooled = concat([max, sum]) -> single K=128 projection against the prepacked
    # lane-dense (2E, 128) weight (gender col 0, age cols 1..10, rest zero).
    pooled = jnp.concatenate([max_pool, sum_pool], axis=-1)               # (TB, 2E = 128)
    out = jnp.dot(pooled, w_ref[...], preferred_element_type=jnp.float32) + b_ref[...]  # (TB, 128)

    col = lax.broadcasted_iota(jnp.int32, (tb, OUT_LANES), 1)

    # pred_gender = sigmoid(gender)  (EUP; essentially free)
    gender = out[:, COL_GENDER:COL_GENDER + 1]                            # (TB, 1)
    pred_gender = jax.nn.sigmoid(gender)

    # pred_age = argmax(age, 1) -- first maximal index, done over the slab lanes
    age_mask = jnp.logical_and(col >= COL_AGE0, col < COL_AGE0 + NUM_AGE)
    age_vals = jnp.where(age_mask, out, -jnp.inf)
    age_max = jnp.max(age_vals, axis=1, keepdims=True)
    is_max = jnp.logical_and(age_mask, age_vals == age_max)
    idx_f = (col - COL_AGE0).astype(jnp.float32)
    pred_age = jnp.min(jnp.where(is_max, idx_f, jnp.float32(OUT_LANES)),
                       axis=1, keepdims=True)                             # (TB, 1) float index

    # Single lane-dense store of the whole slab.
    slab = jnp.where(col == COL_PRED_GENDER, pred_gender, out)
    slab = jnp.where(col == COL_PRED_AGE, pred_age, slab)
    out_ref[...] = slab


def prepack_params(params):
    """One-time fold of dense_age/dense_gender (+ biases) into lane-dense (2E,128)/(1,128)."""
    emb, wa, ba, wg, bg = params
    E = emb.shape[1]
    w = jnp.zeros((2 * E, OUT_LANES), jnp.float32)
    w = w.at[:, COL_GENDER:COL_GENDER + 1].set(wg)
    w = w.at[:, COL_AGE0:COL_AGE0 + NUM_AGE].set(wa)
    b = jnp.zeros((1, OUT_LANES), jnp.float32)
    b = b.at[:, COL_GENDER:COL_GENDER + 1].set(bg)
    b = b.at[:, COL_AGE0:COL_AGE0 + NUM_AGE].set(ba)
    return emb.astype(jnp.float32), w, b


@jax.jit
def cls_model2_forward(ad_ids, packed):
    """Returns (gender, age, pred_age, pred_gender); the module's return value is gender."""
    emb, w, b = packed
    B = ad_ids.shape[0]
    L = min(ad_ids.shape[1], MAX_LEN)
    x_in = ad_ids[:, :L].astype(jnp.int32)            # glue: [:, :MAX_LEN] slice

    TB = _choose_tb(B)
    B_pad = ((B + TB - 1) // TB) * TB
    if B_pad != B:                                    # pad batch with all-zero sequences
        x_in = jnp.concatenate([x_in, jnp.zeros((B_pad - B, L), jnp.int32)], axis=0)

    grid = (B_pad // TB,)
    slab = pl.pallas_call(
        cls_model2_kernel,
        out_shape=jax.ShapeDtypeStruct((B_pad, OUT_LANES), jnp.float32),
        grid=grid,
        in_specs=[
            pl.BlockSpec((TB, L), lambda i: (i, 0)),          # ids, 2-D block tiled over batch
            pl.BlockSpec(emb.shape, lambda i: (0, 0)),         # pinned weights
            pl.BlockSpec(w.shape, lambda i: (0, 0)),
            pl.BlockSpec(b.shape, lambda i: (0, 0)),
        ],
        out_specs=pl.BlockSpec((TB, OUT_LANES), lambda i: (i, 0)),
        compiler_params=pltpu.CompilerParams(
            dimension_semantics=("parallel",),
            vmem_limit_bytes=32 * 1024 * 1024,
        ),
    )(x_in, emb, w, b)

    slab = slab[:B]                                   # drop batch padding
    gender = slab[:, COL_GENDER:COL_GENDER + 1]
    age = slab[:, COL_AGE0:COL_AGE0 + NUM_AGE]
    pred_gender = slab[:, COL_PRED_GENDER:COL_PRED_GENDER + 1]
    pred_age = slab[:, COL_PRED_AGE].astype(jnp.int32)
    return gender, age, pred_age, pred_gender


def reference_forward(ad_ids, params):
    """Pure-JAX reference of the PyTorch forward."""
    emb, wa, ba, wg, bg = params
    x_in = ad_ids[:, :MAX_LEN]
    mask = (x_in == 0)
    x = emb[x_in]                                     # (B, L, E)
    x_max = jnp.max(jnp.where(mask[..., None], -jnp.inf, x), axis=1)
    x_sum = jnp.sum(jnp.where(mask[..., None], 0.0, x), axis=1)
    pooled = jnp.concatenate([x_max, x_sum], axis=-1)  # (B, 2E)
    age = pooled @ wa + ba[0]
    gender = pooled @ wg + bg[0]
    pred_age = jnp.argmax(age, axis=1)
    pred_gender = jax.nn.sigmoid(gender)
    return gender, age, pred_age, pred_gender


def init_params(key):
    k1, k2, k3, k4, k5 = jax.random.split(key, 5)
    emb = 0.05 * jax.random.normal(k1, (VOCAB_SIZE, EMB_SIZE), jnp.float32)
    wa = 0.05 * jax.random.normal(k2, (2 * EMB_SIZE, NUM_AGE), jnp.float32)
    ba = 0.01 * jax.random.normal(k3, (1, NUM_AGE), jnp.float32)
    wg = 0.05 * jax.random.normal(k4, (2 * EMB_SIZE, 1), jnp.float32)
    bg = 0.01 * jax.random.normal(k5, (1, 1), jnp.float32)
    return emb, wa, ba, wg, bg


def _check(ad_ids, params, packed):
    gender, age, pred_age, pred_gender = cls_model2_forward(ad_ids, packed)
    gender = jax.block_until_ready(gender)
    ref_gender, ref_age, ref_pred_age, ref_pred_gender = reference_forward(ad_ids, params)
    B = ad_ids.shape[0]
    assert gender.shape == (B, 1) and age.shape == (B, NUM_AGE)
    assert np.allclose(np.asarray(gender), np.asarray(ref_gender), atol=1e-5, rtol=1e-5)
    assert np.allclose(np.asarray(age), np.asarray(ref_age), atol=1e-5, rtol=1e-5)
    assert np.allclose(np.asarray(pred_gender), np.asarray(ref_pred_gender), atol=1e-5, rtol=1e-5)
    assert np.array_equal(np.asarray(pred_age), np.asarray(ref_pred_age))


if __name__ == "__main__":
    key = jax.random.PRNGKey(0)
    pkey, ikey, ikey2 = jax.random.split(key, 3)
    params = init_params(pkey)
    packed = prepack_params(params)

    # Small demo batch (longer than MAX_LEN to exercise the [:, :MAX_LEN] slice),
    # with some in-window padding (id == 0) positions.
    B, SEQ = 2, 20
    ad_ids = jax.random.randint(ikey, (B, SEQ), 1, VOCAB_SIZE, dtype=jnp.int32)
    ad_ids = ad_ids.at[:, MAX_LEN - 4:].set(0)
    _check(ad_ids, params, packed)

    # Second case exercising grid > 1 and batch padding (TB multiple of 8, 2 grid steps).
    B2 = 20
    ad_ids2 = jax.random.randint(ikey2, (B2, SEQ), 1, VOCAB_SIZE, dtype=jnp.int32)
    ad_ids2 = ad_ids2.at[:, MAX_LEN - 3:].set(0)
    _check(ad_ids2, params, packed)

    print("KERNEL_OK")
</pallas_src>

<mosaic_0001>
module attributes {stable_mosaic.version = 11 : i64} {
  func.func @cls_model2_kernel(%arg0: i32, %arg1: memref<2x16xi32, #tpu.memory_space<vmem>>, %arg2: memref<256x64xf32, #tpu.memory_space<vmem>>, %arg3: memref<128x128xf32, #tpu.memory_space<vmem>>, %arg4: memref<1x128xf32, #tpu.memory_space<vmem>>, %arg5: memref<2x128xf32, #tpu.memory_space<vmem>>) attributes {dimension_semantics = [#tpu.dimension_semantics<parallel>], iteration_bounds = array<i64: 1>, scalar_prefetch = 0 : i64, scratch_operands = 0 : i64, tpu.core_type = #tpu.core_type<tc>, window_params = [{transform_indices = @transform_0, window_bounds = array<i64: 2, 16>}, {pipeline_mode = #tpu.pipeline_mode<synchronous>, transform_indices = @transform_1, window_bounds = array<i64: 256, 64>}, {pipeline_mode = #tpu.pipeline_mode<synchronous>, transform_indices = @transform_2, window_bounds = array<i64: 128, 128>}, {pipeline_mode = #tpu.pipeline_mode<synchronous>, transform_indices = @transform_3, window_bounds = array<i64: 1, 128>}, {transform_indices = @transform_4, window_bounds = array<i64: 2, 128>}]} {
    %c0 = arith.constant 0 : index
    %c0_0 = arith.constant 0 : index
    %0 = vector.load %arg1[%c0, %c0_0] : memref<2x16xi32, #tpu.memory_space<vmem>>, vector<2x16xi32>
    %1 = vector.shape_cast %0 : vector<2x16xi32> to vector<2x16x1xi32>
    %c0_i32 = arith.constant 0 : i32
    %2 = vector.broadcast %c0_i32 : i32 to vector<2x16x1xi32>
    %3 = arith.cmpi ne, %1, %2 : vector<2x16x1xi32>
    %4 = tpu.iota {dimensions = array<i32: 2>} : vector<2x16x256xi32>
    %5 = vector.broadcast %1 : vector<2x16x1xi32> to vector<2x16x256xi32>
    %6 = arith.cmpi eq, %5, %4 : vector<2x16x256xi32>
    %7 = vector.broadcast %3 : vector<2x16x1xi1> to vector<2x16x256xi1>
    %8 = arith.andi %6, %7 : vector<2x16x256xi1>
    %9 = vector.shape_cast %8 : vector<2x16x256xi1> to vector<32x256xi1>
    %10 = arith.extui %9 : vector<32x256xi1> to vector<32x256xi32>
    %11 = arith.sitofp %10 : vector<32x256xi32> to vector<32x256xf32>
    %c0_1 = arith.constant 0 : index
    %c0_2 = arith.constant 0 : index
    %12 = vector.load %arg2[%c0_1, %c0_2] : memref<256x64xf32, #tpu.memory_space<vmem>>, vector<256x64xf32>
    %cst = arith.constant dense<0.000000e+00> : vector<32x64xf32>
    %13 = tpu.matmul %11, %12, %cst {dimension_numbers = #tpu.dot_dimension_numbers<[1], [0], [0], [1], [0, 0, 1, 1], [], []>} : vector<32x256xf32>, vector<256x64xf32>, vector<32x64xf32> -> vector<32x64xf32>
    %14 = vector.shape_cast %13 : vector<32x64xf32> to vector<2x16x64xf32>
    %cst_3 = arith.constant dense<0.000000e+00> : vector<2x64xf32>
    %15 = vector.multi_reduction <add>, %14, %cst_3 [1] : vector<2x16x64xf32> to vector<2x64xf32>
    %cst_4 = arith.constant 0xFF800000 : f32
    %16 = vector.shape_cast %3 : vector<2x16x1xi1> to vector<2x16x1xi1>
    %17 = vector.broadcast %16 : vector<2x16x1xi1> to vector<2x16x64xi1>
    %18 = vector.broadcast %cst_4 : f32 to vector<2x16x64xf32>
    %19 = arith.select %17, %14, %18 : vector<2x16x64xi1>, vector<2x16x64xf32>
    %cst_5 = arith.constant dense<0xFF800000> : vector<2x64xf32>
    %20 = vector.multi_reduction <maximumf>, %19, %cst_5 [1] : vector<2x16x64xf32> to vector<2x64xf32>
    %21 = tpu.concatenate %20, %15 in 1 : vector<2x64xf32>, vector<2x64xf32> -> vector<2x128xf32>
    %c0_6 = arith.constant 0 : index
    %c0_7 = arith.constant 0 : index
    %22 = vector.load %arg3[%c0_6, %c0_7] : memref<128x128xf32, #tpu.memory_space<vmem>>, vector<128x128xf32>
    %cst_8 = arith.constant dense<0.000000e+00> : vector<2x128xf32>
    %23 = tpu.matmul %21, %22, %cst_8 {dimension_numbers = #tpu.dot_dimension_numbers<[1], [0], [0], [1], [0, 0, 1, 1], [], []>} : vector<2x128xf32>, vector<128x128xf32>, vector<2x128xf32> -> vector<2x128xf32>
    %c0_9 = arith.constant 0 : index
    %c0_10 = arith.constant 0 : index
    %24 = vector.load %arg4[%c0_9, %c0_10] : memref<1x128xf32, #tpu.memory_space<vmem>>, vector<1x128xf32>
    %25 = vector.broadcast %24 : vector<1x128xf32> to vector<2x128xf32>
    %26 = arith.addf %23, %25 : vector<2x128xf32>
    %27 = tpu.iota {dimensions = array<i32: 1>} : vector<2x128xi32>
    %28 = vector.extract_strided_slice %26 {offsets = [0, 0], sizes = [2, 1], strides = [1, 1]} : vector<2x128xf32> to vector<2x1xf32>
    %29 = arith.negf %28 : vector<2x1xf32>
    %30 = math.exp %29 : vector<2x1xf32>
    %cst_11 = arith.constant 1.000000e+00 : f32
    %31 = vector.broadcast %cst_11 : f32 to vector<2x1xf32>
    %32 = arith.addf %31, %30 : vector<2x1xf32>
    %33 = arith.divf %31, %32 : vector<2x1xf32>
    %c1_i32 = arith.constant 1 : i32
    %34 = vector.broadcast %c1_i32 : i32 to vector<2x128xi32>
    %35 = arith.cmpi sge, %27, %34 : vector<2x128xi32>
    %c11_i32 = arith.constant 11 : i32
    %36 = vector.broadcast %c11_i32 : i32 to vector<2x128xi32>
    %37 = arith.cmpi slt, %27, %36 : vector<2x128xi32>
    %38 = arith.andi %35, %37 : vector<2x128xi1>
    %cst_12 = arith.constant 0xFF800000 : f32
    %39 = vector.broadcast %cst_12 : f32 to vector<2x128xf32>
    %40 = arith.select %38, %26, %39 : vector<2x128xi1>, vector<2x128xf32>
    %cst_13 = arith.constant dense<0xFF800000> : vector<2xf32>
    %41 = vector.multi_reduction <maximumf>, %40, %cst_13 [1] : vector<2x128xf32> to vector<2xf32>
    %42 = vector.shape_cast %41 : vector<2xf32> to vector<2x1xf32>
    %43 = vector.broadcast %42 : vector<2x1xf32> to vector<2x128xf32>
    %44 = arith.cmpf oeq, %40, %43 : vector<2x128xf32>
    %45 = arith.andi %38, %44 : vector<2x128xi1>
    %c1_i32_14 = arith.constant 1 : i32
    %46 = vector.broadcast %c1_i32_14 : i32 to vector<2x128xi32>
    %47 = arith.subi %27, %46 : vector<2x128xi32>
    %48 = arith.sitofp %47 : vector<2x128xi32> to vector<2x128xf32>
    %cst_15 = arith.constant 1.280000e+02 : f32
    %49 = vector.broadcast %cst_15 : f32 to vector<2x128xf32>
    %50 = arith.select %45, %48, %49 : vector<2x128xi1>, vector<2x128xf32>
    %cst_16 = arith.constant dense<0x7F800000> : vector<2xf32>
    %51 = vector.multi_reduction <minimumf>, %50, %cst_16 [1] : vector<2x128xf32> to vector<2xf32>
    %52 = vector.shape_cast %51 : vector<2xf32> to vector<2x1xf32>
    %c11_i32_17 = arith.constant 11 : i32
    %53 = vector.broadcast %c11_i32_17 : i32 to vector<2x128xi32>
    %54 = arith.cmpi eq, %27, %53 : vector<2x128xi32>
    %55 = vector.shape_cast %33 : vector<2x1xf32> to vector<2x1xf32>
    %56 = vector.broadcast %55 : vector<2x1xf32> to vector<2x128xf32>
    %57 = arith.select %54, %56, %26 : vector<2x128xi1>, vector<2x128xf32>
    %c12_i32 = arith.constant 12 : i32
    %58 = vector.broadcast %c12_i32 : i32 to vector<2x128xi32>
    %59 = arith.cmpi eq, %27, %58 : vector<2x128xi32>
    %60 = vector.shape_cast %52 : vector<2x1xf32> to vector<2x1xf32>
    %61 = vector.broadcast %60 : vector<2x1xf32> to vector<2x128xf32>
    %62 = arith.select %59, %61, %57 : vector<2x128xi1>, vector<2x128xf32>
    %c0_18 = arith.constant 0 : index
    %c0_19 = arith.constant 0 : index
    %63 = vector.load %arg5[%c0_18, %c0_19] : memref<2x128xf32, #tpu.memory_space<vmem>>, vector<2x128xf32>
    tpu.vector_store %arg5[%c0_18, %c0_19], %62 {strides = array<i32>} : memref<2x128xf32, #tpu.memory_space<vmem>>, vector<2x128xf32>,
    return
  }
  func.func @transform_0(%arg0: i32) -> (i32, i32) {
    %c0_i32 = arith.constant 0 : i32
    %c0_i32_0 = arith.constant 0 : i32
    return %arg0, %c0_i32 : i32, i32
  }
  func.func @transform_1(%arg0: i32) -> (i32, i32) {
    %c0_i32 = arith.constant 0 : i32
    %c0_i32_0 = arith.constant 0 : i32
    %c0_i32_1 = arith.constant 0 : i32
    return %c0_i32, %c0_i32_0 : i32, i32
  }
  func.func @transform_2(%arg0: i32) -> (i32, i32) {
    %c0_i32 = arith.constant 0 : i32
    %c0_i32_0 = arith.constant 0 : i32
    %c0_i32_1 = arith.constant 0 : i32
    return %c0_i32, %c0_i32_0 : i32, i32
  }
  func.func @transform_3(%arg0: i32) -> (i32, i32) {
    %c0_i32 = arith.constant 0 : i32
    %c0_i32_0 = arith.constant 0 : i32
    %c0_i32_1 = arith.constant 0 : i32
    return %c0_i32, %c0_i32_0 : i32, i32
  }
  func.func @transform_4(%arg0: i32) -> (i32, i32) {
    %c0_i32 = arith.constant 0 : i32
    %c0_i32_0 = arith.constant 0 : i32
    return %arg0, %c0_i32 : i32, i32
  }
}

</mosaic_0001>

<llo_original>
// kernel: cls_model2_forward.1
$region0: #{cls_model2_forward.1}
  #allocation0 [shape = 'u32[]', space=smem, size = 0x4, offset = 0x4, fixed_abs, tag = 'smem constant byte address 0x4 - core index']
  #allocation1 [shape = 'u32[72,128]{1,0:T(1,128)}', space=vmem, size = 0x9000, scoped, tag = 'internal scratch']
  %s0 = inlined_call_operand.vmem [shape: s32[2,16], index: 0, kind: input, shape index: {}]
  %s1 = inlined_call_operand.vmem [shape: f32[256,64], index: 1, kind: input, shape index: {}]
  %s2 = inlined_call_operand.vmem [shape: f32[128,128], index: 2, kind: input, shape index: {}]
  %s3 = inlined_call_operand.vmem [shape: f32[1,128], index: 3, kind: input, shape index: {}]
  %s4 = inlined_call_operand.vmem [shape: f32[2,128], index: 4, kind: output, shape index: {}]
  %s5 = sld [smem:[#allocation0]]
  $region26: #{cls_model2_forward.1} parent=0
    _
  %s7 = ssub.s32 1, %s5
  %s8 = scalar_select 0, %s7, %s5
  // Predicated region
  $region2: #{cls_model2_forward.1} parent=0 // pred_check
    _
  $region3: #{cls_model2_forward.1} parent=0 // pred_check_branch
    %10 = sbr.rel (0) target = $region5
  $region4: #{cls_model2_forward.1} parent=0 // pred_region
    _
  $region5: #{cls_model2_forward.1} parent=0 // pred_fallthru
    _
  // Predicated region
  $region6: #{cls_model2_forward.1} parent=0 // pred_check
    _
  $region7: #{cls_model2_forward.1} parent=0 // pred_check_branch
    %12 = sbr.rel (0) target = $region9
  $region8: #{cls_model2_forward.1} parent=0 // pred_region
    _
  $region9: #{cls_model2_forward.1} parent=0 // pred_fallthru
    _
  // Predicated region
  $region10: #{cls_model2_forward.1} parent=0 // pred_check
    _
  $region11: #{cls_model2_forward.1} parent=0 // pred_check_branch
    %14 = sbr.rel (0) target = $region13
  $region12: #{cls_model2_forward.1} parent=0 // pred_region
    _
  $region13: #{cls_model2_forward.1} parent=0 // pred_fallthru
    _
  // Predicated region
  $region14: #{cls_model2_forward.1} parent=0 // pred_check
    _
  $region15: #{cls_model2_forward.1} parent=0 // pred_check_branch
    %16 = sbr.rel (0) target = $region17
  $region16: #{cls_model2_forward.1} parent=0 // pred_region
    _
  $region17: #{cls_model2_forward.1} parent=0 // pred_fallthru
    _
  %v17 = vld [vmem:[%s0] sm:$0x3]
  %v18 = vperm.slane %v17, 0
  %v19 = vlaneseq
  %v20 = vshrl.u32 %v19, 7
  %22 = vset.pattern.permute.xlu0 %v20
  %23 = vperm.xlu0 %22, %v18
  %v24 = vpop.permute.xlu0 %23
  %v25 = vlaneseq
  %v26 = vshrl.u32 %v25, 7
  %v27 = vadd.s32 %v26, 8
  %28 = vset.pattern.permute.xlu0 %v27
  %29 = vperm.xlu0 %28, %v18
  %v30 = vpop.permute.xlu0 %29
  %v31 = vperm.slane %v17, 1
  %v32 = vlaneseq
  %v33 = vshrl.u32 %v32, 7
  %35 = vset.pattern.permute.xlu0 %v33
  %36 = vperm.xlu0 %35, %v31
  %v37 = vpop.permute.xlu0 %36
  %v38 = vlaneseq
  %v39 = vshrl.u32 %v38, 7
  %v40 = vadd.s32 %v39, 8
  %41 = vset.pattern.permute.xlu0 %v40
  %42 = vperm.xlu0 %41, %v31
  %v43 = vpop.permute.xlu0 %42
  %vm44 = vcmp.ne.s32.totalorder %v24, 0
  %vm45 = vcmp.ne.s32.totalorder %v30, 0
  %vm46 = vcmp.ne.s32.totalorder %v37, 0
  %vm47 = vcmp.ne.s32.totalorder %v43, 0
  %v48 = vlaneseq
  %v49 = vand.u32 %v48, 127
  %v50 = vadd.s32 %v49, 128
  %vm51 = vcmp.eq.s32.totalorder %v24, %v49
  %vm52 = vcmp.eq.s32.totalorder %v24, %v50
  %vm53 = vcmp.eq.s32.totalorder %v30, %v49
  %vm54 = vcmp.eq.s32.totalorder %v30, %v50
  %vm55 = vcmp.eq.s32.totalorder %v37, %v49
  %vm56 = vcmp.eq.s32.totalorder %v37, %v50
  %vm57 = vcmp.eq.s32.totalorder %v43, %v49
  %vm58 = vcmp.eq.s32.totalorder %v43, %v50
  %v59 = vsel %vm44, 1, 0
  %v60 = vsel %vm45, 1, 0
  %v61 = vsel %vm46, 1, 0
  %v62 = vsel %vm47, 1, 0
  %vm63 = vcmp.eq.s32.totalorder %v59, 1
  %vm64 = vcmp.eq.s32.totalorder %v60, 1
  %vm65 = vcmp.eq.s32.totalorder %v61, 1
  %vm66 = vcmp.eq.s32.totalorder %v62, 1
  %vm67 = vmand %vm51, %vm63
  %vm68 = vmand %vm52, %vm63
  %vm69 = vmand %vm53, %vm64
  %vm70 = vmand %vm54, %vm64
  %vm71 = vmand %vm55, %vm65
  %vm72 = vmand %vm56, %vm65
  %vm73 = vmand %vm57, %vm66
  %vm74 = vmand %vm58, %vm66
  %v75 = vsel %vm67, 1, 0
  %v76 = vsel %vm68, 1, 0
  %v77 = vsel %vm69, 1, 0
  %v78 = vsel %vm70, 1, 0
  %v79 = vsel %vm71, 1, 0
  %v80 = vsel %vm72, 1, 0
  %v81 = vsel %vm73, 1, 0
  %v82 = vsel %vm74, 1, 0
  %v83 = vcvt.s32.f32 %v75
  %v84 = vcvt.s32.f32 %v76
  %v85 = vcvt.s32.f32 %v77
  %v86 = vcvt.s32.f32 %v78
  %v87 = vcvt.s32.f32 %v79
  %v88 = vcvt.s32.f32 %v80
  %v89 = vcvt.s32.f32 %v81
  %v90 = vcvt.s32.f32 %v82
  %v91 = vld [vmem:[%s1] sm:$0xff]
  %v92 = vld [vmem:[%s1 + $0x8] sm:$0xff]
  %v93 = vld [vmem:[%s1 + $0x10] sm:$0xff]
  %v94 = vld [vmem:[%s1 + $0x18] sm:$0xff]
  %v95 = vld [vmem:[%s1 + $0x20] sm:$0xff]
  %v96 = vld [vmem:[%s1 + $0x28] sm:$0xff]
  %v97 = vld [vmem:[%s1 + $0x30] sm:$0xff]
  %v98 = vld [vmem:[%s1 + $0x38] sm:$0xff]
  %v99 = vld [vmem:[%s1 + $0x40] sm:$0xff]
  %v100 = vld [vmem:[%s1 + $0x48] sm:$0xff]
  %v101 = vld [vmem:[%s1 + $0x50] sm:$0xff]
  %v102 = vld [vmem:[%s1 + $0x58] sm:$0xff]
  %v103 = vld [vmem:[%s1 + $0x60] sm:$0xff]
  %v104 = vld [vmem:[%s1 + $0x68] sm:$0xff]
  %v105 = vld [vmem:[%s1 + $0x70] sm:$0xff]
  %v106 = vld [vmem:[%s1 + $0x78] sm:$0xff]
  %v107 = vld [vmem:[%s1 + $0x80] sm:$0xff]
  %v108 = vld [vmem:[%s1 + $0x88] sm:$0xff]
  %v109 = vld [vmem:[%s1 + $0x90] sm:$0xff]
  %v110 = vld [vmem:[%s1 + $0x98] sm:$0xff]
  %v111 = vld [vmem:[%s1 + $0xa0] sm:$0xff]
  %v112 = vld [vmem:[%s1 + $0xa8] sm:$0xff]
  %v113 = vld [vmem:[%s1 + $0xb0] sm:$0xff]
  %v114 = vld [vmem:[%s1 + $0xb8] sm:$0xff]
  %v115 = vld [vmem:[%s1 + $0xc0] sm:$0xff]
  %v116 = vld [vmem:[%s1 + $0xc8] sm:$0xff]
  %v117 = vld [vmem:[%s1 + $0xd0] sm:$0xff]
  %v118 = vld [vmem:[%s1 + $0xd8] sm:$0xff]
  %v119 = vld [vmem:[%s1 + $0xe0] sm:$0xff]
  %v120 = vld [vmem:[%s1 + $0xe8] sm:$0xff]
  %v121 = vld [vmem:[%s1 + $0xf0] sm:$0xff]
  %v122 = vld [vmem:[%s1 + $0xf8] sm:$0xff]
  %123 = vmatpush.msra.mxu0 %v106
  %124 = vmatpush.msra.mxu0 %v105
  %125 = vmatpush.msra.mxu0 %v104
  %126 = vmatpush.msra.mxu0 %v103
  %127 = vmatpush.msra.mxu0 %v102
  %128 = vmatpush.msra.mxu0 %v101
  %129 = vmatpush.msra.mxu0 %v100
  %130 = vmatpush.msra.mxu0 %v99
  %131 = vmatpush.msra.mxu0 %v98
  %132 = vmatpush.msra.mxu0 %v97
  %133 = vmatpush.msra.mxu0 %v96
  %134 = vmatpush.msra.mxu0 %v95
  %135 = vmatpush.msra.mxu0 %v94
  %136 = vmatpush.msra.mxu0 %v93
  %137 = vmatpush.msra.mxu0 %v92
  %138 = vmatpush.msra.mxu0 %v91
  %139 = vmatmul.f32.gmra.mxu0 %v83
  %v140 = vpop.f32.mrf.mxu0
  %v141 = vadd.f32 0.0, %v140
  %142 = vmatmul.f32.gmra.mxu0 %v85
  %v143 = vpop.f32.mrf.mxu0
  %v144 = vadd.f32 0.0, %v143
  %145 = vmatmul.f32.gmra.mxu0 %v87
  %v146 = vpop.f32.mrf.mxu0
  %v147 = vadd.f32 0.0, %v146
  %148 = vmatmul.f32.gmra.mxu0 %v89
  %v149 = vpop.f32.mrf.mxu0
  %v150 = vadd.f32 0.0, %v149
  %151 = vdwg.mxu0
  %152 = vmatpush.msra.mxu0 %v122
  %153 = vmatpush.msra.mxu0 %v121
  %154 = vmatpush.msra.mxu0 %v120
  %155 = vmatpush.msra.mxu0 %v119
  %156 = vmatpush.msra.mxu0 %v118
  %157 = vmatpush.msra.mxu0 %v117
  %158 = vmatpush.msra.mxu0 %v116
  %159 = vmatpush.msra.mxu0 %v115
  %160 = vmatpush.msra.mxu0 %v114
  %161 = vmatpush.msra.mxu0 %v113
  %162 = vmatpush.msra.mxu0 %v112
  %163 = vmatpush.msra.mxu0 %v111
  %164 = vmatpush.msra.mxu0 %v110
  %165 = vmatpush.msra.mxu0 %v109
  %166 = vmatpush.msra.mxu0 %v108
  %167 = vmatpush.msra.mxu0 %v107
  %168 = vmatmul.f32.gmra.mxu0 %v84
  %v169 = vpop.f32.mrf.mxu0
  %v170 = vadd.f32 %v141, %v169
  %171 = vmatmul.f32.gmra.mxu0 %v86
  %v172 = vpop.f32.mrf.mxu0
  %v173 = vadd.f32 %v144, %v172
  %174 = vmatmul.f32.gmra.mxu0 %v88
  %v175 = vpop.f32.mrf.mxu0
  %v176 = vadd.f32 %v147, %v175
  %177 = vmatmul.f32.gmra.mxu0 %v90
  %v178 = vpop.f32.mrf.mxu0
  %v179 = vadd.f32 %v150, %v178
  %180 = vdwg.mxu0
  %vm181 = vcmask 523264
  %v182 = vsel %vm181, %v170, 0.0
  %v183 = vsel %vm181, %v173, 0.0
  %v184 = vadd.f32 %v182, %v183
  %v185 = vrot.slane %v184, 4
  %v186 = vadd.f32 %v184, %v185
  %v187 = vrot.slane %v186, 2
  %v188 = vadd.f32 %v186, %v187
  %v189 = vrot.slane %v188, 1
  %v190 = vadd.f32 %v188, %v189
  %v191 = vsel %vm181, %v176, 0.0
  %v192 = vsel %vm181, %v179, 0.0
  %v193 = vadd.f32 %v191, %v192
  %v194 = vrot.slane %v193, 4
  %v195 = vadd.f32 %v193, %v194
  %v196 = vrot.slane %v195, 2
  %v197 = vadd.f32 %v195, %v196
  %v198 = vrot.slane %v197, 1
  %v199 = vadd.f32 %v197, %v198
  %v200 = vsel %vm63, %v170, -inf
  %v201 = vsel %vm64, %v173, -inf
  %v202 = vsel %vm65, %v176, -inf
  %v203 = vsel %vm66, %v179, -inf
  %v204 = vsel %vm181, %v200, -inf
  %v205 = vsel %vm181, %v201, -inf
  %v206 = vmax.f32 %v204, %v205
  %v207 = vrot.slane %v206, 4
  %v208 = vmax.f32 %v206, %v207
  %v209 = vrot.slane %v208, 2
  %v210 = vmax.f32 %v208, %v209
  %v211 = vrot.slane %v210, 1
  %v212 = vmax.f32 %v210, %v211
  %v213 = vsel %vm181, %v202, -inf
  %v214 = vsel %vm181, %v203, -inf
  %v215 = vmax.f32 %v213, %v214
  %v216 = vrot.slane %v215, 4
  %v217 = vmax.f32 %v215, %v216
  %v218 = vrot.slane %v217, 2
  %v219 = vmax.f32 %v217, %v218
  %v220 = vrot.slane %v219, 1
  %v221 = vmax.f32 %v219, %v220
  %vm224 = vcmask 1041409
  %v225 = vsel %vm224, %v221, %v212
  %v229 = vsel %vm224, %v199, %v190
  %230 = vrot.lane.b32.xlu0 %v229, 64
  %v231 = vpop.permute.xlu0 %230
  %v233 = vsel %vm181, %v225, %v231
  %v234 = vld [vmem:[%s2] sm:$0xff]
  %v235 = vld [vmem:[%s2 + $0x8] sm:$0xff]
  %v236 = vld [vmem:[%s2 + $0x10] sm:$0xff]
  %v237 = vld [vmem:[%s2 + $0x18] sm:$0xff]
  %v238 = vld [vmem:[%s2 + $0x20] sm:$0xff]
  %v239 = vld [vmem:[%s2 + $0x28] sm:$0xff]
  %v240 = vld [vmem:[%s2 + $0x30] sm:$0xff]
  %v241 = vld [vmem:[%s2 + $0x38] sm:$0xff]
  %v242 = vld [vmem:[%s2 + $0x40] sm:$0xff]
  %v243 = vld [vmem:[%s2 + $0x48] sm:$0xff]
  %v244 = vld [vmem:[%s2 + $0x50] sm:$0xff]
  %v245 = vld [vmem:[%s2 + $0x58] sm:$0xff]
  %v246 = vld [vmem:[%s2 + $0x60] sm:$0xff]
  %v247 = vld [vmem:[%s2 + $0x68] sm:$0xff]
  %v248 = vld [vmem:[%s2 + $0x70] sm:$0xff]
  %v249 = vld [vmem:[%s2 + $0x78] sm:$0xff]
  %v250 = vld [vmem:[%s3] sm:$0x1]
  %v252 = vperm.slane %v250, 0
  %254 = vmatpush.msra.mxu0 %v249
  %255 = vmatpush.msra.mxu0 %v248
  %256 = vmatpush.msra.mxu0 %v247
  %257 = vmatpush.msra.mxu0 %v246
  %258 = vmatpush.msra.mxu0 %v245
  %259 = vmatpush.msra.mxu0 %v244
  %260 = vmatpush.msra.mxu0 %v243
  %261 = vmatpush.msra.mxu0 %v242
  %262 = vmatpush.msra.mxu0 %v241
  %263 = vmatpush.msra.mxu0 %v240
  %264 = vmatpush.msra.mxu0 %v239
  %265 = vmatpush.msra.mxu0 %v238
  %266 = vmatpush.msra.mxu0 %v237
  %267 = vmatpush.msra.mxu0 %v236
  %268 = vmatpush.msra.mxu0 %v235
  %269 = vmatpush.msra.mxu0 %v234
  %270 = vmatmul.f32.gmra.mxu0 %v233
  %v271 = vpop.f32.mrf.mxu0
  %v272 = vadd.f32 %v252, %v271
  %273 = vdwg.mxu0
  %v274 = vxor.u32 %v272, 2147483648
  %v275 = vmul.f32 %v274, 1.442695
  %v276 = vpow.pop %v275
  %v277 = vadd.f32 %v276, 1.0
  %v278 = vrcp.pop %v277
  %v279 = vmul.f32 %v277, %v278
  %v280 = vsub.f32 1.0, %v279
  %v281 = vmul.f32 %v278, %v280
  %v282 = vadd.f32 %v278, %v281
  %vm283 = vweird.f32 %v277
  %vm284 = vweird.f32 %v278
  %vm285 = vmor %vm283, %vm284
  %v286 = vsel %vm285, %v278, %v282
  %v287 = vand.u32 2147483647, %v277
  %vm288 = vcmp.eq.f32.partialorder %v287, 8.507059e+37
  %v289 = vand.u32 %v277, 2147483648
  %v290 = vor.u32 1.1754944e-38, %v289
  %v291 = vsel %vm288, %v290, %v286
  %v292 = vmul.f32 1.0, %v291
  %vm293 = vcmp.ge.s32.totalorder %v49, 1
  %vm294 = vcmp.lt.s32.totalorder %v49, 11
  %vm295 = vmand %vm293, %vm294
  %v296 = vsel %vm295, %v272, -inf
  %vm297 = vcmask 1041408
  %v298 = vsel %vm297, %v296, -inf
  %299 = vmax.xlane.f32.xlu0 %v298
  %v300 = vpop.xlane.xlu0 %299
  %vm301 = vcmp.eq.f32.partialorder %v296, %v300
  %vm302 = vmand %vm295, %vm301
  %v303 = vsub.s32 %v49, 1
  %v304 = vcvt.s32.f32 %v303
  %v305 = vsel %vm302, %v304, 128.0
  %v306 = vsel %vm297, %v305, inf
  %307 = vmin.xlane.f32.xlu0 %v306
  %v308 = vpop.xlane.xlu0 %307
  %vm309 = vcmp.eq.s32.totalorder %v49, 11
  %311 = vset.pattern.permute.xlu0 0
  %312 = vperm.xlu0 %311, %v292
  %v313 = vpop.permute.xlu0 %312
  %v315 = vsel %vm309, %v313, %v272
  %vm316 = vcmp.eq.s32.totalorder %v49, 12
  %v317 = vsel %vm316, %v308, %v315
  %318 = vst [vmem:[%s4] sm:$0x3] %v317
  // Predicated region
  $region18: #{cls_model2_forward.1} parent=0 // pred_check
    _
  $region19: #{cls_model2_forward.1} parent=0 // pred_check_branch
    %320 = sbr.rel (0) target = $region21
  $region20: #{cls_model2_forward.1} parent=0 // pred_region
    _
  $region21: #{cls_model2_forward.1} parent=0 // pred_fallthru
    _
  // Predicated region
  $region22: #{cls_model2_forward.1} parent=0 // pred_check
    _
  $region23: #{cls_model2_forward.1} parent=0 // pred_check_branch
    %322 = sbr.rel (0) target = $region25
  $region24: #{cls_model2_forward.1} parent=0 // pred_region
    _
  $region25: #{cls_model2_forward.1} parent=0 // pred_fallthru
    _

</llo_original>
